<compile_context>
chip_gen: v7x
topology: tpu7x:2x2x1
jax: 0.10.0
libtpu: 0.0.40
codegen_flags: <defaults>
</compile_context>

<pallas_src>
import functools

import jax
import jax.numpy as jnp
from jax.experimental import pallas as pl
from jax.experimental.pallas import tpu as pltpu


def _attention_kernel(dec_ref, enc_ref, wdec_ref, wenc_ref, b_ref, out_ref,
                      *, use_bf16):
    # dec_ref : (TB, dec_hid)        enc_ref : (L, TB, 2*enc_hid)  (seq-major block)
    # wdec_ref: (dec_hid, attn)      wenc_ref: (2*enc_hid, attn)
    # b_ref   : (1, attn)            out_ref : (TB, L)
    L, TB, E = enc_ref.shape
    A = wenc_ref.shape[1]
    mm_dtype = jnp.bfloat16 if use_bf16 else jnp.float32

    # Decoder projection, hoisted: one (TB, dec_hid) @ (dec_hid, attn) per block.
    dec_proj = jnp.dot(dec_ref[...].astype(mm_dtype),
                       wdec_ref[...].astype(mm_dtype),
                       preferred_element_type=jnp.float32)           # (TB, A)
    dec_proj = dec_proj + b_ref[...]                                  # + bias (f32)

    # Encoder projection: a single MXU matmul over all TB*L rows of this block.
    # TB % 8 == 0, so collapsing (L, TB) -> (L*TB) is a pure re-tiling (no moves).
    enc2 = enc_ref[...].reshape(L * TB, E).astype(mm_dtype)           # (L*TB, E)
    enc_proj = jnp.dot(enc2, wenc_ref[...].astype(mm_dtype),
                       preferred_element_type=jnp.float32)            # (L*TB, A)
    enc_proj = enc_proj.reshape(L, TB, A)                             # (L, TB, A)

    energy = jnp.tanh(enc_proj + dec_proj[None, :, :])                # (L, TB, A) (EUP tanh)
    att = jnp.sum(energy, axis=-1)                                    # (L, TB)  lane-reduce (XLU)
    att = att.T                                                       # (TB, L): L on lanes

    # Numerically stable softmax over src_len (lane axis).
    m = jnp.max(att, axis=-1, keepdims=True)                          # (TB, 1)
    e = jnp.exp(att - m)                                              # (TB, L)
    denom = jnp.sum(e, axis=-1, keepdims=True)                        # (TB, 1)
    r = pl.reciprocal(denom, approx=True)                             # EUP rcp (free slot)
    r = r * (2.0 - denom * r)                                         # one Newton step -> ~f32
    out_ref[...] = e * r                                              # lane-dense store


def _round_up(x, m):
    return ((x + m - 1) // m) * m


def attention_forward(decoder_hidden, encoder_outputs, weight, bias, *,
                      enc_hid_dim, dec_hid_dim, attn_dim,
                      block_b=None, use_bf16=False):
    """decoder_hidden: [B, dec_hid]; encoder_outputs: [L, B, 2*enc_hid] (PyTorch layout).

    weight: [attn_dim, 2*enc_hid + dec_hid] (nn.Linear layout), bias: [attn_dim].
    Returns softmax attention weights of shape [B, L].
    """
    B = decoder_hidden.shape[0]
    L = encoder_outputs.shape[0]
    enc_feat = 2 * enc_hid_dim
    assert encoder_outputs.shape == (L, B, enc_feat)
    assert decoder_hidden.shape == (B, dec_hid_dim)

    # ---- pick the batch tile TB -------------------------------------------
    if block_b is None:
        # Aim for >= 256 matmul rows per grid step (fills the 2x256 MXU on
        # v6e/v7x), keep the double-buffered encoder block small enough for
        # VMEM (safe on v7x's 64 MiB), and keep TB a multiple of 8 sublanes so
        # the in-kernel reshape is a pure re-tiling.
        tb = _round_up(max(1, pl.cdiv(256, L)), 8)
        cap = max(8, ((6 * 1024 * 1024) // max(1, 2 * L * enc_feat * 4)) // 8 * 8)
        tb = min(tb, cap)
        tb = min(tb, _round_up(B, 8))            # don't over-pad tiny batches
    else:
        tb = block_b
    B_pad = _round_up(B, tb)

    # Pad the batch so TB divides it; padded rows are sliced off afterwards and
    # cannot influence real rows (softmax is per-row over L).
    if B_pad != B:
        decoder_hidden = jnp.pad(decoder_hidden, ((0, B_pad - B), (0, 0)))
        encoder_outputs = jnp.pad(encoder_outputs, ((0, 0), (0, B_pad - B), (0, 0)))

    # Split the Linear weight so concat(dec, enc) @ W.T == dec @ W_dec + enc @ W_enc
    # (concat order of the PyTorch module is (decoder, encoder)).
    w_t = weight.T                               # [attn_in, attn_dim]
    w_dec = w_t[:dec_hid_dim, :]                 # [dec_hid, attn_dim]
    w_enc = w_t[dec_hid_dim:, :]                 # [2*enc_hid, attn_dim]
    b2d = bias.reshape(1, attn_dim)

    kernel = functools.partial(_attention_kernel, use_bf16=use_bf16)
    out = pl.pallas_call(
        kernel,
        out_shape=jax.ShapeDtypeStruct((B_pad, L), jnp.float32),
        grid_spec=pltpu.PrefetchScalarGridSpec(
            num_scalar_prefetch=0,
            grid=(B_pad // tb,),
            in_specs=[
                pl.BlockSpec((tb, dec_hid_dim), lambda i: (i, 0)),
                pl.BlockSpec((L, tb, enc_feat), lambda i: (0, i, 0)),   # original [L,B,E] layout
                pl.BlockSpec((dec_hid_dim, attn_dim), lambda i: (0, 0)),
                pl.BlockSpec((enc_feat, attn_dim), lambda i: (0, 0)),
                pl.BlockSpec((1, attn_dim), lambda i: (0, 0)),
            ],
            out_specs=pl.BlockSpec((tb, L), lambda i: (i, 0)),          # lane-dense (B, L)
        ),
        compiler_params=pltpu.CompilerParams(
            dimension_semantics=("parallel",),   # shards batch tiles across v7x's 2 TCs
            vmem_limit_bytes=32 * 1024 * 1024,
        ),
    )(decoder_hidden, encoder_outputs, w_dec, w_enc, b2d)

    return out[:B] if B_pad != B else out


def _reference(decoder_hidden, encoder_outputs, weight, bias):
    L = encoder_outputs.shape[0]
    rep = jnp.repeat(decoder_hidden[:, None, :], L, axis=1)      # [B, L, dec]
    enc = jnp.transpose(encoder_outputs, (1, 0, 2))              # [B, L, 2*enc]
    x = jnp.concatenate([rep, enc], axis=2)                      # [B, L, attn_in]
    energy = jnp.tanh(x @ weight.T + bias)                       # [B, L, attn_dim]
    att = jnp.sum(energy, axis=2)                                # [B, L]
    return jax.nn.softmax(att, axis=1)


if __name__ == "__main__":
    # small shapes consistent with the module
    B, src_len = 2, 8
    enc_hid_dim, dec_hid_dim, attn_dim = 16, 32, 32
    attn_in = 2 * enc_hid_dim + dec_hid_dim

    key = jax.random.PRNGKey(0)
    k1, k2, k3, k4 = jax.random.split(key, 4)
    decoder_hidden = jax.random.normal(k1, (B, dec_hid_dim), dtype=jnp.float32)
    encoder_outputs = jax.random.normal(k2, (src_len, B, 2 * enc_hid_dim), dtype=jnp.float32)
    # deterministic parameter init (nn.Linear-like uniform)
    bound = 1.0 / (attn_in ** 0.5)
    weight = jax.random.uniform(k3, (attn_dim, attn_in), minval=-bound, maxval=bound,
                                dtype=jnp.float32)
    bias = jax.random.uniform(k4, (attn_dim,), minval=-bound, maxval=bound, dtype=jnp.float32)

    out = attention_forward(decoder_hidden, encoder_outputs, weight, bias,
                            enc_hid_dim=enc_hid_dim, dec_hid_dim=dec_hid_dim,
                            attn_dim=attn_dim)
    out = jax.block_until_ready(out)

    ref = _reference(decoder_hidden, encoder_outputs, weight, bias)
    assert out.shape == (B, src_len)
    assert jnp.allclose(out, ref, atol=2e-5, rtol=2e-5), "mismatch vs reference"
    print("KERNEL_OK")
</pallas_src>

<mosaic_0001>
module attributes {stable_mosaic.version = 11 : i64} {
  func.func @_attention_kernel(%arg0: i32, %arg1: memref<8x32xf32, #tpu.memory_space<vmem>>, %arg2: memref<8x8x32xf32, #tpu.memory_space<vmem>>, %arg3: memref<32x32xf32, #tpu.memory_space<vmem>>, %arg4: memref<32x32xf32, #tpu.memory_space<vmem>>, %arg5: memref<1x32xf32, #tpu.memory_space<vmem>>, %arg6: memref<8x8xf32, #tpu.memory_space<vmem>>) attributes {dimension_semantics = [#tpu.dimension_semantics<parallel>], iteration_bounds = array<i64: 1>, scalar_prefetch = 0 : i64, scratch_operands = 0 : i64, tpu.core_type = #tpu.core_type<tc>, window_params = [{transform_indices = @transform_0, window_bounds = array<i64: 8, 32>}, {transform_indices = @transform_1, window_bounds = array<i64: 8, 8, 32>}, {pipeline_mode = #tpu.pipeline_mode<synchronous>, transform_indices = @transform_2, window_bounds = array<i64: 32, 32>}, {pipeline_mode = #tpu.pipeline_mode<synchronous>, transform_indices = @transform_3, window_bounds = array<i64: 32, 32>}, {pipeline_mode = #tpu.pipeline_mode<synchronous>, transform_indices = @transform_4, window_bounds = array<i64: 1, 32>}, {transform_indices = @transform_5, window_bounds = array<i64: 8, 8>}]} {
    %c0 = arith.constant 0 : index
    %c0_0 = arith.constant 0 : index
    %0 = vector.load %arg1[%c0, %c0_0] : memref<8x32xf32, #tpu.memory_space<vmem>>, vector<8x32xf32>
    %c0_1 = arith.constant 0 : index
    %c0_2 = arith.constant 0 : index
    %1 = vector.load %arg3[%c0_1, %c0_2] : memref<32x32xf32, #tpu.memory_space<vmem>>, vector<32x32xf32>
    %cst = arith.constant dense<0.000000e+00> : vector<8x32xf32>
    %2 = tpu.matmul %0, %1, %cst {dimension_numbers = #tpu.dot_dimension_numbers<[1], [0], [0], [1], [0, 0, 1, 1], [], []>} : vector<8x32xf32>, vector<32x32xf32>, vector<8x32xf32> -> vector<8x32xf32>
    %c0_3 = arith.constant 0 : index
    %c0_4 = arith.constant 0 : index
    %3 = vector.load %arg5[%c0_3, %c0_4] : memref<1x32xf32, #tpu.memory_space<vmem>>, vector<1x32xf32>
    %4 = vector.broadcast %3 : vector<1x32xf32> to vector<8x32xf32>
    %5 = arith.addf %2, %4 : vector<8x32xf32>
    %c0_5 = arith.constant 0 : index
    %c0_6 = arith.constant 0 : index
    %c0_7 = arith.constant 0 : index
    %6 = vector.load %arg2[%c0_5, %c0_6, %c0_7] : memref<8x8x32xf32, #tpu.memory_space<vmem>>, vector<8x8x32xf32>
    %7 = vector.shape_cast %6 : vector<8x8x32xf32> to vector<64x32xf32>
    %c0_8 = arith.constant 0 : index
    %c0_9 = arith.constant 0 : index
    %8 = vector.load %arg4[%c0_8, %c0_9] : memref<32x32xf32, #tpu.memory_space<vmem>>, vector<32x32xf32>
    %cst_10 = arith.constant dense<0.000000e+00> : vector<64x32xf32>
    %9 = tpu.matmul %7, %8, %cst_10 {dimension_numbers = #tpu.dot_dimension_numbers<[1], [0], [0], [1], [0, 0, 1, 1], [], []>} : vector<64x32xf32>, vector<32x32xf32>, vector<64x32xf32> -> vector<64x32xf32>
    %10 = vector.shape_cast %9 : vector<64x32xf32> to vector<8x8x32xf32>
    %11 = vector.shape_cast %5 : vector<8x32xf32> to vector<1x8x32xf32>
    %12 = vector.broadcast %11 : vector<1x8x32xf32> to vector<8x8x32xf32>
    %13 = arith.addf %10, %12 : vector<8x8x32xf32>
    %14 = math.tanh %13 : vector<8x8x32xf32>
    %cst_11 = arith.constant dense<0.000000e+00> : vector<8x8xf32>
    %15 = vector.multi_reduction <add>, %14, %cst_11 [2] : vector<8x8x32xf32> to vector<8x8xf32>
    %16 = tpu.transpose %15, [1, 0] : vector<8x8xf32> -> vector<8x8xf32>
    %cst_12 = arith.constant dense<0xFF800000> : vector<8xf32>
    %17 = vector.multi_reduction <maximumf>, %16, %cst_12 [1] : vector<8x8xf32> to vector<8xf32>
    %18 = vector.shape_cast %17 : vector<8xf32> to vector<8x1xf32>
    %19 = vector.broadcast %18 : vector<8x1xf32> to vector<8x8xf32>
    %20 = arith.subf %16, %19 : vector<8x8xf32>
    %21 = math.exp %20 : vector<8x8xf32>
    %cst_13 = arith.constant dense<0.000000e+00> : vector<8xf32>
    %22 = vector.multi_reduction <add>, %21, %cst_13 [1] : vector<8x8xf32> to vector<8xf32>
    %23 = vector.shape_cast %22 : vector<8xf32> to vector<8x1xf32>
    %24 = tpu.reciprocal %23 {approx = true} : vector<8x1xf32> -> vector<8x1xf32>
    %25 = arith.mulf %23, %24 : vector<8x1xf32>
    %cst_14 = arith.constant 2.000000e+00 : f32
    %26 = vector.broadcast %cst_14 : f32 to vector<8x1xf32>
    %27 = arith.subf %26, %25 : vector<8x1xf32>
    %28 = arith.mulf %24, %27 : vector<8x1xf32>
    %29 = vector.broadcast %28 : vector<8x1xf32> to vector<8x8xf32>
    %30 = arith.mulf %21, %29 : vector<8x8xf32>
    %c0_15 = arith.constant 0 : index
    %c0_16 = arith.constant 0 : index
    %31 = vector.load %arg6[%c0_15, %c0_16] : memref<8x8xf32, #tpu.memory_space<vmem>>, vector<8x8xf32>
    tpu.vector_store %arg6[%c0_15, %c0_16], %30 {strides = array<i32>} : memref<8x8xf32, #tpu.memory_space<vmem>>, vector<8x8xf32>,
    return
  }
  func.func @transform_0(%arg0: i32) -> (i32, i32) {
    %c0_i32 = arith.constant 0 : i32
    %c0_i32_0 = arith.constant 0 : i32
    return %arg0, %c0_i32 : i32, i32
  }
  func.func @transform_1(%arg0: i32) -> (i32, i32, i32) {
    %c0_i32 = arith.constant 0 : i32
    %c0_i32_0 = arith.constant 0 : i32
    %c0_i32_1 = arith.constant 0 : i32
    return %c0_i32, %arg0, %c0_i32_0 : i32, i32, i32
  }
  func.func @transform_2(%arg0: i32) -> (i32, i32) {
    %c0_i32 = arith.constant 0 : i32
    %c0_i32_0 = arith.constant 0 : i32
    %c0_i32_1 = arith.constant 0 : i32
    return %c0_i32, %c0_i32_0 : i32, i32
  }
  func.func @transform_3(%arg0: i32) -> (i32, i32) {
    %c0_i32 = arith.constant 0 : i32
    %c0_i32_0 = arith.constant 0 : i32
    %c0_i32_1 = arith.constant 0 : i32
    return %c0_i32, %c0_i32_0 : i32, i32
  }
  func.func @transform_4(%arg0: i32) -> (i32, i32) {
    %c0_i32 = arith.constant 0 : i32
    %c0_i32_0 = arith.constant 0 : i32
    %c0_i32_1 = arith.constant 0 : i32
    return %c0_i32, %c0_i32_0 : i32, i32
  }
  func.func @transform_5(%arg0: i32) -> (i32, i32) {
    %c0_i32 = arith.constant 0 : i32
    %c0_i32_0 = arith.constant 0 : i32
    return %arg0, %c0_i32 : i32, i32
  }
}

</mosaic_0001>

<llo_original>
// kernel: tpu_custom_call.1
$region0: #{tpu_custom_call.1}
  #allocation0 [shape = 'u32[]', space=smem, size = 0x4, offset = 0x4, fixed_abs, tag = 'smem constant byte address 0x4 - core index']
  #allocation1 [shape = 'u32[144,128]{1,0:T(1,128)}', space=vmem, size = 0x12000, scoped, tag = 'internal scratch']
  %s0 = inlined_call_operand.hbm [shape: f32[8,32], index: 0, kind: input, shape index: {}]
  %s1 = inlined_call_operand.hbm [shape: f32[8,8,32], index: 1, kind: input, shape index: {}]
  %s2 = inlined_call_operand.hbm [shape: f32[32,32], index: 2, kind: input, shape index: {}]
  %s3 = inlined_call_operand.hbm [shape: f32[32,32], index: 3, kind: input, shape index: {}]
  %s4 = inlined_call_operand.vmem [shape: f32[1,32], index: 4, kind: input, shape index: {}]
  %s5 = inlined_call_operand.hbm [shape: f32[8,8], index: 5, kind: output, shape index: {}]
  %s6 = sld [smem:[#allocation0]]
  $region46: #{tpu_custom_call.1} parent=0
    _
  %s8 = ssub.s32 1, %s6
  %s9 = scalar_select 0, %s8, %s6
  $region1: #{tpu_custom_call.1} parent=0
    #allocation2 [shape = 'u8[4096]{0}', space=vmem, size = 0x1000, scoped, tag = 'input window, operand 0, single buffered']
    #allocation3 [shape = 's32[1]{0}', space=sflag, size = 0x4, scoped, tag = 'scoped memory for tpu_custom_call.1']
    #allocation4 [shape = 's32[1]{0}', space=sflag, size = 0x4, scoped, tag = 'scoped memory for tpu_custom_call.1']
    #allocation5 [shape = 'u8[32768]{0}', space=vmem, size = 0x8000, scoped, tag = 'input window, operand 1, single buffered']
    #allocation6 [shape = 's32[1]{0}', space=sflag, size = 0x4, scoped, tag = 'scoped memory for tpu_custom_call.1']
    #allocation7 [shape = 'u8[16384]{0}', space=vmem, size = 0x4000, scoped, tag = 'input window, operand 2, single buffered']
    #allocation8 [shape = 'u8[16384]{0}', space=vmem, size = 0x4000, scoped, tag = 'input window, operand 3, single buffered']
    #allocation9 [shape = 's32[1]{0}', space=sflag, size = 0x4, scoped, tag = 'scoped memory for tpu_custom_call.1']
    #allocation10 [shape = 'u8[4096]{0}', space=vmem, size = 0x1000, scoped, tag = 'output window, operand 0, single buffered']
    %10 = vsyncpa [#allocation3], 0
    %11 = vsyncpa [#allocation6], 0
    %12 = vsyncpa [#allocation9], 0
    %13 = vsyncpa [#allocation4], 0
    // Predicated region
    $region2: #{tpu_custom_call.1} parent=1 // pred_check
      _
    $region3: #{tpu_custom_call.1} parent=1 // pred_check_branch
      %15 = sbr.rel (0) target = $region5
    $region4: #{tpu_custom_call.1} parent=1 // pred_region
      %s17 = ssub.s32 128, 128
      %18 = vsyncadd [#allocation3], %s17
      %s20 = sshll.u32 [#allocation2], 4
      %s21 = int_to_ptr.vmem [resolvable:$true] %s20
      %23 = dma.hbm_to_vmem [thread:$0]  %s0, 128, %s21, [#allocation3]
    $region5: #{tpu_custom_call.1} parent=1 // pred_fallthru
      _
    // Predicated region
    $region6: #{tpu_custom_call.1} parent=1 // pred_check
      _
    $region7: #{tpu_custom_call.1} parent=1 // pred_check_branch
      %25 = sbr.rel (0) target = $region9
    $region8: #{tpu_custom_call.1} parent=1 // pred_region
      %s27 = ssub.s32 1024, 1024
      %28 = vsyncadd [#allocation6], %s27
      %s29 = sshll.u32 [#allocation5], 4
      %s30 = int_to_ptr.vmem [resolvable:$true] %s29
      %35 = dma.hbm_to_vmem [thread:$0]  %s1, 1024, %s30, [#allocation6], 128, 128, 8
    $region9: #{tpu_custom_call.1} parent=1 // pred_fallthru
      _
    // Predicated region
    $region10: #{tpu_custom_call.1} parent=1 // pred_check
      _
    $region11: #{tpu_custom_call.1} parent=1 // pred_check_branch
      %37 = sbr.rel (0) target = $region13
    $region12: #{tpu_custom_call.1} parent=1 // pred_region
      %s39 = ssub.s32 512, 512
      %40 = vsyncadd [#allocation6], %s39
      %s41 = sshll.u32 [#allocation7], 4
      %s42 = int_to_ptr.vmem [resolvable:$true] %s41
      %47 = dma.hbm_to_vmem [thread:$0]  %s2, 512, %s42, [#allocation6], 128, 128, 8
    $region13: #{tpu_custom_call.1} parent=1 // pred_fallthru
      _
    // Predicated region
    $region14: #{tpu_custom_call.1} parent=1 // pred_check
      _
    $region15: #{tpu_custom_call.1} parent=1 // pred_check_branch
      %49 = sbr.rel (0) target = $region17
    $region16: #{tpu_custom_call.1} parent=1 // pred_region
      %s51 = ssub.s32 512, 512
      %52 = vsyncadd [#allocation9], %s51
      %s53 = sshll.u32 [#allocation8], 4
      %s54 = int_to_ptr.vmem [resolvable:$true] %s53
      %59 = dma.hbm_to_vmem [thread:$0]  %s3, 512, %s54, [#allocation9], 128, 128, 8
    $region17: #{tpu_custom_call.1} parent=1 // pred_fallthru
      _
    // Predicated region
    $region18: #{tpu_custom_call.1} parent=1 // pred_check
      _
    $region19: #{tpu_custom_call.1} parent=1 // pred_check_branch
      %61 = sbr.rel (0) target = $region21
    $region20: #{tpu_custom_call.1} parent=1 // pred_region
      _
    $region21: #{tpu_custom_call.1} parent=1 // pred_fallthru
      _
    // Predicated region
    $region22: #{tpu_custom_call.1} parent=1 // pred_check
      _
    $region23: #{tpu_custom_call.1} parent=1 // pred_check_branch
      %63 = sbr.rel (0) target = $region25
    $region24: #{tpu_custom_call.1} parent=1 // pred_region
      %64 = dma.done [#allocation3], 128
    $region25: #{tpu_custom_call.1} parent=1 // pred_fallthru
      _
    // Predicated region
    $region26: #{tpu_custom_call.1} parent=1 // pred_check
      _
    $region27: #{tpu_custom_call.1} parent=1 // pred_check_branch
      %66 = sbr.rel (0) target = $region29
    $region28: #{tpu_custom_call.1} parent=1 // pred_region
      %67 = dma.done [#allocation6], 1024
    $region29: #{tpu_custom_call.1} parent=1 // pred_fallthru
      _
    // Predicated region
    $region30: #{tpu_custom_call.1} parent=1 // pred_check
      _
    $region31: #{tpu_custom_call.1} parent=1 // pred_check_branch
      %69 = sbr.rel (0) target = $region33
    $region32: #{tpu_custom_call.1} parent=1 // pred_region
      %70 = dma.done [#allocation6], 512
    $region33: #{tpu_custom_call.1} parent=1 // pred_fallthru
      _
    // Predicated region
    $region34: #{tpu_custom_call.1} parent=1 // pred_check
      _
    $region35: #{tpu_custom_call.1} parent=1 // pred_check_branch
      %72 = sbr.rel (0) target = $region37
    $region36: #{tpu_custom_call.1} parent=1 // pred_region
      %73 = dma.done [#allocation9], 512
    $region37: #{tpu_custom_call.1} parent=1 // pred_fallthru
      _
    %v74 = vld [vmem:[#allocation2] sm:$0xff]
    %v75 = vld [vmem:[#allocation7] sm:$0xff]
    %v76 = vld [vmem:[#allocation7 + $0x8] sm:$0xff]
    %v77 = vld [vmem:[#allocation7 + $0x10] sm:$0xff]
    %v78 = vld [vmem:[#allocation7 + $0x18] sm:$0xff]
    %v79 = vld [vmem:[%s4] sm:$0x1]
    %v81 = vlaneseq
    %v82 = vshrl.u32 %v81, 7
    %v83 = vsub.s32 0, %v82
    %v84 = vrot.slane %v79, %v83
    %vm86 = vcmask 261120
    %v88 = vsel %vm86, %v74, 0
    %90 = vmatprep.subr.mxu0 0.0
    %91 = vmatpush1.msra.mxu0 %v75
    %92 = vmatprep.subr.mxu0 0.0
    %93 = vmatpush1.msra.mxu0 %v76
    %94 = vmatprep.subr.mxu0 0.0
    %95 = vmatpush1.msra.mxu0 %v77
    %96 = vmatprep.subr.mxu0 0.0
    %97 = vmatpush1.msra.mxu0 %v78
    %98 = vmatprep.subr.mxu0 0.0
    %99 = vmatpush1.msra.mxu0 0.0
    %100 = vmatprep.subr.mxu0 0.0
    %101 = vmatpush1.msra.mxu0 0.0
    %102 = vmatprep.subr.mxu0 0.0
    %103 = vmatpush1.msra.mxu0 0.0
    %104 = vmatprep.subr.mxu0 0.0
    %105 = vmatpush1.msra.mxu0 0.0
    %106 = vmatprep.subr.mxu0 0.0
    %107 = vmatpush1.msra.mxu0 0.0
    %108 = vmatprep.subr.mxu0 0.0
    %109 = vmatpush1.msra.mxu0 0.0
    %110 = vmatprep.subr.mxu0 0.0
    %111 = vmatpush1.msra.mxu0 0.0
    %112 = vmatprep.subr.mxu0 0.0
    %113 = vmatpush1.msra.mxu0 0.0
    %114 = vmatprep.subr.mxu0 0.0
    %115 = vmatpush1.msra.mxu0 0.0
    %116 = vmatprep.subr.mxu0 0.0
    %117 = vmatpush1.msra.mxu0 0.0
    %118 = vmatprep.subr.mxu0 0.0
    %119 = vmatpush1.msra.mxu0 0.0
    %120 = vmatprep.subr.mxu0 0.0
    %121 = vmatpush1.msra.mxu0 0.0
    %122 = vmatprep.subr.mxu0 0.0
    %123 = vmatpush1.msra.mxu0 0.0
    %124 = vmatprep.subr.mxu0 0.0
    %125 = vmatpush1.msra.mxu0 0.0
    %126 = vmatprep.subr.mxu0 0.0
    %127 = vmatpush1.msra.mxu0 0.0
    %128 = vmatprep.subr.mxu0 0.0
    %129 = vmatpush1.msra.mxu0 0.0
    %130 = vmatprep.subr.mxu0 0.0
    %131 = vmatpush1.msra.mxu0 0.0
    %132 = vmatprep.subr.mxu0 0.0
    %133 = vmatpush1.msra.mxu0 0.0
    %134 = vmatprep.subr.mxu0 0.0
    %135 = vmatpush1.msra.mxu0 0.0
    %136 = vmatprep.subr.mxu0 0.0
    %137 = vmatpush1.msra.mxu0 0.0
    %138 = vmatprep.subr.mxu0 0.0
    %139 = vmatpush1.msra.mxu0 0.0
    %140 = vmatprep.subr.mxu0 0.0
    %141 = vmatpush1.msra.mxu0 0.0
    %142 = vmatprep.subr.mxu0 0.0
    %143 = vmatpush1.msra.mxu0 0.0
    %144 = vmatprep.subr.mxu0 0.0
    %145 = vmatpush1.msra.mxu0 0.0
    %146 = vmatprep.subr.mxu0 0.0
    %147 = vmatpush1.msra.mxu0 0.0
    %148 = vmatprep.subr.mxu0 0.0
    %149 = vmatpush1.msra.mxu0 0.0
    %150 = vmatprep.subr.mxu0 0.0
    %151 = vmatpush1.msra.mxu0 0.0
    %152 = vmatprep.subr.mxu0 0.0
    %153 = vmatpush1.msra.mxu0 0.0
    %154 = vmatprep.mubr.f32.mxu0 0.0
    %155 = vmatmul.mubr.f32.gmra.mrb[0].mxu0 %v88
    %v156 = vpop.f32.mrb[0].mxu0
    %v157 = vadd.f32 %v84, %v156
    %v158 = vpop.f32.mrb[0].mxu0
    %159 = vdwg.mxu0
    %v160 = vld [vmem:[#allocation5] sm:$0xff]
    %v161 = vld [vmem:[#allocation5 + $0x8] sm:$0xff]
    %v162 = vld [vmem:[#allocation5 + $0x10] sm:$0xff]
    %v163 = vld [vmem:[#allocation5 + $0x18] sm:$0xff]
    %v164 = vld [vmem:[#allocation5 + $0x20] sm:$0xff]
    %v165 = vld [vmem:[#allocation5 + $0x28] sm:$0xff]
    %v166 = vld [vmem:[#allocation5 + $0x30] sm:$0xff]
    %v167 = vld [vmem:[#allocation5 + $0x38] sm:$0xff]
    %v168 = vld [vmem:[#allocation8] sm:$0xff]
    %v169 = vld [vmem:[#allocation8 + $0x8] sm:$0xff]
    %v170 = vld [vmem:[#allocation8 + $0x10] sm:$0xff]
    %v171 = vld [vmem:[#allocation8 + $0x18] sm:$0xff]
    %v173 = vsel %vm86, %v160, 0
    %v176 = vsel %vm86, %v161, 0
    %v179 = vsel %vm86, %v162, 0
    %v182 = vsel %vm86, %v163, 0
    %v185 = vsel %vm86, %v164, 0
    %v188 = vsel %vm86, %v165, 0
    %v191 = vsel %vm86, %v166, 0
    %v194 = vsel %vm86, %v167, 0
    %196 = vmatprep.subr.mxu0 0.0
    %197 = vmatpush1.msra.mxu0 %v168
    %198 = vmatprep.subr.mxu0 0.0
    %199 = vmatpush1.msra.mxu0 %v169
    %200 = vmatprep.subr.mxu0 0.0
    %201 = vmatpush1.msra.mxu0 %v170
    %202 = vmatprep.subr.mxu0 0.0
    %203 = vmatpush1.msra.mxu0 %v171
    %204 = vmatprep.subr.mxu0 0.0
    %205 = vmatpush1.msra.mxu0 0.0
    %206 = vmatprep.subr.mxu0 0.0
    %207 = vmatpush1.msra.mxu0 0.0
    %208 = vmatprep.subr.mxu0 0.0
    %209 = vmatpush1.msra.mxu0 0.0
    %210 = vmatprep.subr.mxu0 0.0
    %211 = vmatpush1.msra.mxu0 0.0
    %212 = vmatprep.subr.mxu0 0.0
    %213 = vmatpush1.msra.mxu0 0.0
    %214 = vmatprep.subr.mxu0 0.0
    %215 = vmatpush1.msra.mxu0 0.0
    %216 = vmatprep.subr.mxu0 0.0
    %217 = vmatpush1.msra.mxu0 0.0
    %218 = vmatprep.subr.mxu0 0.0
    %219 = vmatpush1.msra.mxu0 0.0
    %220 = vmatprep.subr.mxu0 0.0
    %221 = vmatpush1.msra.mxu0 0.0
    %222 = vmatprep.subr.mxu0 0.0
    %223 = vmatpush1.msra.mxu0 0.0
    %224 = vmatprep.subr.mxu0 0.0
    %225 = vmatpush1.msra.mxu0 0.0
    %226 = vmatprep.subr.mxu0 0.0
    %227 = vmatpush1.msra.mxu0 0.0
    %228 = vmatprep.subr.mxu0 0.0
    %229 = vmatpush1.msra.mxu0 0.0
    %230 = vmatprep.subr.mxu0 0.0
    %231 = vmatpush1.msra.mxu0 0.0
    %232 = vmatprep.subr.mxu0 0.0
    %233 = vmatpush1.msra.mxu0 0.0
    %234 = vmatprep.subr.mxu0 0.0
    %235 = vmatpush1.msra.mxu0 0.0
    %236 = vmatprep.subr.mxu0 0.0
    %237 = vmatpush1.msra.mxu0 0.0
    %238 = vmatprep.subr.mxu0 0.0
    %239 = vmatpush1.msra.mxu0 0.0
    %240 = vmatprep.subr.mxu0 0.0
    %241 = vmatpush1.msra.mxu0 0.0
    %242 = vmatprep.subr.mxu0 0.0
    %243 = vmatpush1.msra.mxu0 0.0
    %244 = vmatprep.subr.mxu0 0.0
    %245 = vmatpush1.msra.mxu0 0.0
    %246 = vmatprep.subr.mxu0 0.0
    %247 = vmatpush1.msra.mxu0 0.0
    %248 = vmatprep.subr.mxu0 0.0
    %249 = vmatpush1.msra.mxu0 0.0
    %250 = vmatprep.subr.mxu0 0.0
    %251 = vmatpush1.msra.mxu0 0.0
    %252 = vmatprep.subr.mxu0 0.0
    %253 = vmatpush1.msra.mxu0 0.0
    %254 = vmatprep.subr.mxu0 0.0
    %255 = vmatpush1.msra.mxu0 0.0
    %256 = vmatprep.subr.mxu0 0.0
    %257 = vmatpush1.msra.mxu0 0.0
    %258 = vmatprep.subr.mxu0 0.0
    %259 = vmatpush1.msra.mxu0 0.0
    %260 = vmatprep.mubr.f32.mxu0 0.0
    %261 = vmatmul.mubr.f32.gmra.mrb[0].mxu0 %v173
    %v262 = vpop.f32.mrb[0].mxu0
    %v263 = vadd.f32 0.0, %v262
    %v264 = vpop.f32.mrb[0].mxu0
    %265 = vmatprep.mubr.f32.mxu0 0.0
    %266 = vmatmul.mubr.f32.gmra.mrb[0].mxu0 %v176
    %v267 = vpop.f32.mrb[0].mxu0
    %v268 = vadd.f32 0.0, %v267
    %v269 = vpop.f32.mrb[0].mxu0
    %270 = vmatprep.mubr.f32.mxu0 0.0
    %271 = vmatmul.mubr.f32.gmra.mrb[0].mxu0 %v179
    %v272 = vpop.f32.mrb[0].mxu0
    %v273 = vadd.f32 0.0, %v272
    %v274 = vpop.f32.mrb[0].mxu0
    %275 = vmatprep.mubr.f32.mxu0 0.0
    %276 = vmatmul.mubr.f32.gmra.mrb[0].mxu0 %v182
    %v277 = vpop.f32.mrb[0].mxu0
    %v278 = vadd.f32 0.0, %v277
    %v279 = vpop.f32.mrb[0].mxu0
    %280 = vmatprep.mubr.f32.mxu0 0.0
    %281 = vmatmul.mubr.f32.gmra.mrb[0].mxu0 %v185
    %v282 = vpop.f32.mrb[0].mxu0
    %v283 = vadd.f32 0.0, %v282
    %v284 = vpop.f32.mrb[0].mxu0
    %285 = vmatprep.mubr.f32.mxu0 0.0
    %286 = vmatmul.mubr.f32.gmra.mrb[0].mxu0 %v188
    %v287 = vpop.f32.mrb[0].mxu0
    %v288 = vadd.f32 0.0, %v287
    %v289 = vpop.f32.mrb[0].mxu0
    %290 = vmatprep.mubr.f32.mxu0 0.0
    %291 = vmatmul.mubr.f32.gmra.mrb[0].mxu0 %v191
    %v292 = vpop.f32.mrb[0].mxu0
    %v293 = vadd.f32 0.0, %v292
    %v294 = vpop.f32.mrb[0].mxu0
    %295 = vmatprep.mubr.f32.mxu0 0.0
    %296 = vmatmul.mubr.f32.gmra.mrb[0].mxu0 %v194
    %v297 = vpop.f32.mrb[0].mxu0
    %v298 = vadd.f32 0.0, %v297
    %v299 = vpop.f32.mrb[0].mxu0
    %300 = vdwg.mxu0
    %v301 = vadd.f32 %v263, %v157
    %v302 = vadd.f32 %v268, %v157
    %v303 = vadd.f32 %v273, %v157
    %v304 = vadd.f32 %v278, %v157
    %v305 = vadd.f32 %v283, %v157
    %v306 = vadd.f32 %v288, %v157
    %v307 = vadd.f32 %v293, %v157
    %v308 = vadd.f32 %v298, %v157
    %v309 = vtanh.pop %v301
    %v310 = vtanh.pop %v302
    %v311 = vtanh.pop %v303
    %v312 = vtanh.pop %v304
    %v313 = vtanh.pop %v305
    %v314 = vtanh.pop %v306
    %v315 = vtanh.pop %v307
    %v316 = vtanh.pop %v308
    %v317 = vsel %vm86, %v309, 0.0
    %318 = vadd.xlane.f32.xlu0 %v317
    %v319 = vpop.xlane.xlu0 %318
    %v320 = vsel %vm86, %v310, 0.0
    %321 = vadd.xlane.f32.xlu0 %v320
    %v322 = vpop.xlane.xlu0 %321
    %v323 = vsel %vm86, %v311, 0.0
    %324 = vadd.xlane.f32.xlu0 %v323
    %v325 = vpop.xlane.xlu0 %324
    %v326 = vsel %vm86, %v312, 0.0
    %327 = vadd.xlane.f32.xlu0 %v326
    %v328 = vpop.xlane.xlu0 %327
    %v329 = vsel %vm86, %v313, 0.0
    %330 = vadd.xlane.f32.xlu0 %v329
    %v331 = vpop.xlane.xlu0 %330
    %v332 = vsel %vm86, %v314, 0.0
    %333 = vadd.xlane.f32.xlu0 %v332
    %v334 = vpop.xlane.xlu0 %333
    %v335 = vsel %vm86, %v315, 0.0
    %336 = vadd.xlane.f32.xlu0 %v335
    %v337 = vpop.xlane.xlu0 %336
    %v338 = vsel %vm86, %v316, 0.0
    %339 = vadd.xlane.f32.xlu0 %v338
    %v340 = vpop.xlane.xlu0 %339
    %v349 = vlaneseq
    %v350 = vand.u32 %v349, 127
    %v351 = vlaneseq
    %v352 = vshrl.u32 %v351, 7
    %v353 = vsub.s32 %v350, %v352
    %v354 = vrot.slane %v319, %v353
    %v355 = vlaneseq
    %v356 = vshrl.u32 %v355, 7
    %v357 = vsub.s32 %v350, %v356
    %v358 = vrot.slane %v322, %v357
    %v359 = vlaneseq
    %v360 = vshrl.u32 %v359, 7
    %v361 = vsub.s32 %v350, %v360
    %v362 = vrot.slane %v325, %v361
    %v363 = vlaneseq
    %v364 = vshrl.u32 %v363, 7
    %v365 = vsub.s32 %v350, %v364
    %v366 = vrot.slane %v328, %v365
    %v367 = vlaneseq
    %v368 = vshrl.u32 %v367, 7
    %v369 = vsub.s32 %v350, %v368
    %v370 = vrot.slane %v331, %v369
    %v371 = vlaneseq
    %v372 = vshrl.u32 %v371, 7
    %v373 = vsub.s32 %v350, %v372
    %v374 = vrot.slane %v334, %v373
    %v375 = vlaneseq
    %v376 = vshrl.u32 %v375, 7
    %v377 = vsub.s32 %v350, %v376
    %v378 = vrot.slane %v337, %v377
    %v379 = vlaneseq
    %v380 = vshrl.u32 %v379, 7
    %v381 = vsub.s32 %v350, %v380
    %v382 = vrot.slane %v340, %v381
    %vm383 = vcmask 1041409
    %v384 = vsel %vm383, %v358, %v354
    %vm385 = vcmask 1042434
    %v386 = vsel %vm385, %v362, %v384
    %vm387 = vcmask 1043459
    %v388 = vsel %vm387, %v366, %v386
    %vm389 = vcmask 1044484
    %v390 = vsel %vm389, %v370, %v388
    %vm391 = vcmask 1045509
    %v392 = vsel %vm391, %v374, %v390
    %vm393 = vcmask 1046534
    %v394 = vsel %vm393, %v378, %v392
    %vm395 = vcmask 1047559
    %v396 = vsel %vm395, %v382, %v394
    %398 = vxpose.xlu0.b32.start [1/16] %v396, 128
    %399 = vxpose.xlu0.b32.cont [2/16] 0.0, 128
    %400 = vxpose.xlu0.b32.cont [3/16] 0.0, 128
    %401 = vxpose.xlu0.b32.cont [4/16] 0.0, 128
    %402 = vxpose.xlu0.b32.cont [5/16] 0.0, 128
    %403 = vxpose.xlu0.b32.cont [6/16] 0.0, 128
    %404 = vxpose.xlu0.b32.cont [7/16] 0.0, 128
    %405 = vxpose.xlu0.b32.cont [8/16] 0.0, 128
    %406 = vxpose.xlu0.b32.cont [9/16] 0.0, 128
    %407 = vxpose.xlu0.b32.cont [10/16] 0.0, 128
    %408 = vxpose.xlu0.b32.cont [11/16] 0.0, 128
    %409 = vxpose.xlu0.b32.cont [12/16] 0.0, 128
    %410 = vxpose.xlu0.b32.cont [13/16] 0.0, 128
    %411 = vxpose.xlu0.b32.cont [14/16] 0.0, 128
    %412 = vxpose.xlu0.b32.cont [15/16] 0.0, 128
    %413 = vxpose.xlu0.b32.end [16/16] 0.0, 128
    %v414 = vpop.trf.xlu0
    %v415 = vpop.trf.xlu0
    %v416 = vpop.trf.xlu0
    %v417 = vpop.trf.xlu0
    %v418 = vpop.trf.xlu0
    %v419 = vpop.trf.xlu0
    %v420 = vpop.trf.xlu0
    %v421 = vpop.trf.xlu0
    %v422 = vpop.trf.xlu0
    %v423 = vpop.trf.xlu0
    %v424 = vpop.trf.xlu0
    %v425 = vpop.trf.xlu0
    %v426 = vpop.trf.xlu0
    %v427 = vpop.trf.xlu0
    %v428 = vpop.trf.xlu0
    %v429 = vpop.trf.xlu0
    %vm430 = vcmask 64512
    %v431 = vsel %vm430, %v414, -inf
    %432 = vmax.xlane.f32.xlu0 %v431
    %v433 = vpop.xlane.xlu0 %432
    %v434 = vsub.f32 %v414, %v433
    %v435 = vmul.f32 %v434, 1.442695
    %v436 = vpow.pop %v435
    %v437 = vsel %vm430, %v436, 0.0
    %438 = vadd.xlane.f32.xlu0 %v437
    %v439 = vpop.xlane.xlu0 %438
    %v440 = vrcp.pop %v439
    %v441 = vmul.f32 %v439, %v440
    %v442 = vsub.f32 2.0, %v441
    %v443 = vmul.f32 %v440, %v442
    %v444 = vmul.f32 %v436, %v443
    %445 = vst.msk [vmem:[#allocation10] sm:$0xff] %vm430, %v444
    // Predicated region
    $region38: #{tpu_custom_call.1} parent=1 // pred_check
      _
    $region39: #{tpu_custom_call.1} parent=1 // pred_check_branch
      %447 = sbr.rel (0) target = $region41
    $region40: #{tpu_custom_call.1} parent=1 // pred_region
      %s449 = ssub.s32 128, 128
      %450 = vsyncadd [#allocation4], %s449
      %s452 = sshll.u32 [#allocation10], 4
      %s453 = int_to_ptr.vmem [resolvable:$true] %s452
      %455 = dma.vmem_to_hbm [thread:$0]  %s453, 128, %s5, [#allocation4]
    $region41: #{tpu_custom_call.1} parent=1 // pred_fallthru
      _
    // Predicated region
    $region42: #{tpu_custom_call.1} parent=1 // pred_check
      _
    $region43: #{tpu_custom_call.1} parent=1 // pred_check_branch
      %457 = sbr.rel (0) target = $region45
    $region44: #{tpu_custom_call.1} parent=1 // pred_region
      %458 = dma.done [#allocation4], 128
    $region45: #{tpu_custom_call.1} parent=1 // pred_fallthru
      _
    %459 = vsyncpa [#allocation3], 1
    %460 = vsyncpa [#allocation6], 1
    %461 = vsyncpa [#allocation9], 1
    %462 = vsyncpa [#allocation4], 1

</llo_original>
